<compile_context>
chip_gen: v7x
topology: tpu7x:2x2x1
jax: 0.10.0
libtpu: 0.0.40
codegen_flags: <defaults>
</compile_context>

<pallas_src>
import jax
import jax.numpy as jnp
from jax.experimental import pallas as pl
from jax.experimental.pallas import tpu as pltpu

# Default row tile for the batched (large-B) path.  ~1.3 MB/step of traffic at
# f32 (x: 2048*32*4 + out: 2048*100*4), well inside every generation's scoped
# VMEM default even double-buffered.  On v7x, 4096-8192 amortizes step
# overhead further; pass row_tile= explicitly if desired.
_ROW_TILE = 2048


def _linear_kernel(x_ref, w_ref, b_ref, o_ref):
    # One MXU matmul per tile with f32 accumulation, one VPU bias add
    # (bias row broadcasts along sublanes), one store of (rows, num_classes).
    acc = jnp.dot(x_ref[...], w_ref[...], preferred_element_type=jnp.float32)
    o_ref[...] = (acc + b_ref[...]).astype(o_ref.dtype)


def prep_linear_params(w, b):
    """One-time parameter prep.

    w : [num_classes, in_channels]   (PyTorch nn.Linear layout)
    b : [num_classes]
    Returns (w_t [in_channels, num_classes], b_row [1, num_classes]).
    """
    return jnp.transpose(w), b.reshape(1, -1)


def latent_matching_distiller_mlp(
    x, w_t, b_row, *, row_tile=_ROW_TILE, cast_inputs_to_bf16=False
):
    """Forward pass: returns (fc2(x), x).

    x     : [B, in_channels]            float32
    w_t   : [in_channels, num_classes]  float32 (transposed nn.Linear weight)
    b_row : [1, num_classes]            float32
    """
    B, C = x.shape
    _, N = w_t.shape
    out_dtype = x.dtype

    # Optional bandwidth optimization (v6e/v7x): halve the HBM-facing input
    # bytes.  Accumulation stays f32 inside the kernel.
    if cast_inputs_to_bf16:
        x_in = x.astype(jnp.bfloat16)
        w_in = w_t.astype(jnp.bfloat16)
    else:
        x_in = x
        w_in = w_t

    cost = pl.CostEstimate(
        flops=2 * B * C * N,
        transcendentals=0,
        bytes_accessed=(
            x_in.size * x_in.dtype.itemsize
            + w_in.size * w_in.dtype.itemsize
            + b_row.size * b_row.dtype.itemsize
            + B * N * jnp.dtype(out_dtype).itemsize
        ),
    )

    if B <= row_tile:
        # Small-batch path: grid-less call, whole operands resident in VMEM.
        # No pipeline machinery, no per-step DMA overhead.
        out_fc = pl.pallas_call(
            _linear_kernel,
            out_shape=jax.ShapeDtypeStruct((B, N), out_dtype),
            in_specs=[
                pl.BlockSpec(memory_space=pltpu.MemorySpace.VMEM),
                pl.BlockSpec(memory_space=pltpu.MemorySpace.VMEM),
                pl.BlockSpec(memory_space=pltpu.MemorySpace.VMEM),
            ],
            out_specs=pl.BlockSpec(memory_space=pltpu.MemorySpace.VMEM),
            cost_estimate=cost,
        )(x_in, w_in, b_row)
    else:
        # Batched path: cdiv-tiled rows (partial trailing block is masked by
        # Pallas), 'parallel' so v7x's two TensorCores split the row range.
        # Weights/bias index_maps are constant so they stay VMEM-resident.
        out_fc = pl.pallas_call(
            _linear_kernel,
            out_shape=jax.ShapeDtypeStruct((B, N), out_dtype),
            grid=(pl.cdiv(B, row_tile),),
            in_specs=[
                pl.BlockSpec((row_tile, C), lambda i: (i, 0)),
                pl.BlockSpec((C, N), lambda i: (0, 0)),
                pl.BlockSpec((1, N), lambda i: (0, 0)),
            ],
            out_specs=pl.BlockSpec((row_tile, N), lambda i: (i, 0)),
            compiler_params=pltpu.CompilerParams(
                dimension_semantics=("parallel",)
            ),
            cost_estimate=cost,
        )(x_in, w_in, b_row)

    # TODO(synk): if this op remains bandwidth-bound in practice, fuse the
    # downstream distillation loss (MSE/KL vs. teacher logits) into the kernel
    # so the logits never round-trip through HBM.
    return out_fc, x


if __name__ == "__main__":
    # Shapes consistent with the module: in_channels=32, num_classes=100.
    IN_CHANNELS, NUM_CLASSES = 32, 100

    key = jax.random.PRNGKey(0)
    kx, kw, kb, kx2 = jax.random.split(key, 4)

    # Deterministic parameter init (mimics nn.Linear's uniform(+-1/sqrt(fan_in))).
    bound = 1.0 / (IN_CHANNELS ** 0.5)
    w = jax.random.uniform(
        kw, (NUM_CLASSES, IN_CHANNELS), dtype=jnp.float32, minval=-bound, maxval=bound
    )
    b = jax.random.uniform(
        kb, (NUM_CLASSES,), dtype=jnp.float32, minval=-bound, maxval=bound
    )
    w_t, b_row = prep_linear_params(w, b)

    # --- Path 1: small batch (grid-less, VMEM-resident) ---
    B_SMALL = 8
    x_small = jax.random.normal(kx, (B_SMALL, IN_CHANNELS), dtype=jnp.float32)
    out_small, x_small_out = latent_matching_distiller_mlp(x_small, w_t, b_row)
    jax.block_until_ready((out_small, x_small_out))

    ref_small = x_small @ jnp.transpose(w) + b.reshape(1, -1)
    assert out_small.shape == (B_SMALL, NUM_CLASSES)
    assert x_small_out.shape == (B_SMALL, IN_CHANNELS)
    assert jnp.allclose(out_small, ref_small, atol=1e-5, rtol=1e-5)
    assert jnp.array_equal(x_small_out, x_small)

    # --- Path 2: batched (cdiv row-tiled grid with a partial trailing block,
    #     'parallel' axis for the v7x megacore split) ---
    B_BIG = 4100  # not a multiple of the row tile -> exercises masked tail
    x_big = jax.random.normal(kx2, (B_BIG, IN_CHANNELS), dtype=jnp.float32)
    out_big, x_big_out = latent_matching_distiller_mlp(x_big, w_t, b_row)
    jax.block_until_ready((out_big, x_big_out))

    ref_big = x_big @ jnp.transpose(w) + b.reshape(1, -1)
    assert out_big.shape == (B_BIG, NUM_CLASSES)
    assert jnp.allclose(out_big, ref_big, atol=1e-5, rtol=1e-5)
    assert jnp.array_equal(x_big_out, x_big)

    print("KERNEL_OK")
</pallas_src>

<mosaic_0001>
module attributes {stable_mosaic.version = 11 : i64} {
  func.func @_linear_kernel(%arg0: memref<8x32xf32, #tpu.memory_space<vmem>>, %arg1: memref<32x100xf32, #tpu.memory_space<vmem>>, %arg2: memref<1x100xf32, #tpu.memory_space<vmem>>, %arg3: memref<8x100xf32, #tpu.memory_space<vmem>>) attributes {dimension_semantics = [], scalar_prefetch = 0 : i64, scratch_operands = 0 : i64, tpu.core_type = #tpu.core_type<tc>} {
    %c0 = arith.constant 0 : index
    %c0_0 = arith.constant 0 : index
    %0 = vector.load %arg0[%c0, %c0_0] : memref<8x32xf32, #tpu.memory_space<vmem>>, vector<8x32xf32>
    %c0_1 = arith.constant 0 : index
    %c0_2 = arith.constant 0 : index
    %1 = vector.load %arg1[%c0_1, %c0_2] : memref<32x100xf32, #tpu.memory_space<vmem>>, vector<32x100xf32>
    %cst = arith.constant dense<0.000000e+00> : vector<8x100xf32>
    %2 = tpu.matmul %0, %1, %cst {dimension_numbers = #tpu.dot_dimension_numbers<[1], [0], [0], [1], [0, 0, 1, 1], [], []>} : vector<8x32xf32>, vector<32x100xf32>, vector<8x100xf32> -> vector<8x100xf32>
    %c0_3 = arith.constant 0 : index
    %c0_4 = arith.constant 0 : index
    %3 = vector.load %arg2[%c0_3, %c0_4] : memref<1x100xf32, #tpu.memory_space<vmem>>, vector<1x100xf32>
    %4 = vector.broadcast %3 : vector<1x100xf32> to vector<8x100xf32>
    %5 = arith.addf %2, %4 : vector<8x100xf32>
    %c0_5 = arith.constant 0 : index
    %c0_6 = arith.constant 0 : index
    %6 = vector.load %arg3[%c0_5, %c0_6] : memref<8x100xf32, #tpu.memory_space<vmem>>, vector<8x100xf32>
    tpu.vector_store %arg3[%c0_5, %c0_6], %5 {strides = array<i32>} : memref<8x100xf32, #tpu.memory_space<vmem>>, vector<8x100xf32>,
    return
  }
}

</mosaic_0001>

<llo_original>
// kernel: tpu_custom_call.1
$region0: #{tpu_custom_call.1}
  #allocation0 [shape = 'u32[]', space=smem, size = 0x4, offset = 0x4, fixed_abs, tag = 'smem constant byte address 0x4 - core index']
  #allocation1 [shape = 'u32[144,128]{1,0:T(1,128)}', space=vmem, size = 0x12000, scoped, tag = 'internal scratch']
  %s0 = inlined_call_operand.hbm [shape: f32[8,32], index: 0, kind: input, shape index: {}]
  %s1 = inlined_call_operand.hbm [shape: f32[32,100], index: 1, kind: input, shape index: {}]
  %s2 = inlined_call_operand.vmem [shape: f32[1,100], index: 2, kind: input, shape index: {}]
  %s3 = inlined_call_operand.hbm [shape: f32[8,100], index: 3, kind: output, shape index: {}]
  %s4 = sld [smem:[#allocation0]]
  $region30: #{tpu_custom_call.1} parent=0
    _
  %s6 = ssub.s32 1, %s4
  %s7 = scalar_select 0, %s6, %s4
  $region1: #{tpu_custom_call.1} parent=0
    #allocation2 [shape = 'u8[4096]{0}', space=vmem, size = 0x1000, scoped, tag = 'input window, operand 0, single buffered']
    #allocation3 [shape = 's32[1]{0}', space=sflag, size = 0x4, scoped, tag = 'scoped memory for tpu_custom_call.1']
    #allocation4 [shape = 's32[1]{0}', space=sflag, size = 0x4, scoped, tag = 'scoped memory for tpu_custom_call.1']
    #allocation5 [shape = 'u8[16384]{0}', space=vmem, size = 0x4000, scoped, tag = 'input window, operand 1, single buffered']
    #allocation6 [shape = 's32[1]{0}', space=sflag, size = 0x4, scoped, tag = 'scoped memory for tpu_custom_call.1']
    #allocation7 [shape = 'u8[4096]{0}', space=vmem, size = 0x1000, scoped, tag = 'output window, operand 0, single buffered']
    %8 = vsyncpa [#allocation3], 0
    %9 = vsyncpa [#allocation6], 0
    %10 = vsyncpa [#allocation4], 0
    // Predicated region
    $region2: #{tpu_custom_call.1} parent=1 // pred_check
      _
    $region3: #{tpu_custom_call.1} parent=1 // pred_check_branch
      %12 = sbr.rel (0) target = $region5
    $region4: #{tpu_custom_call.1} parent=1 // pred_region
      %s14 = ssub.s32 128, 128
      %15 = vsyncadd [#allocation3], %s14
      %s17 = sshll.u32 [#allocation2], 4
      %s18 = int_to_ptr.vmem [resolvable:$true] %s17
      %20 = dma.hbm_to_vmem [thread:$0]  %s0, 128, %s18, [#allocation3]
    $region5: #{tpu_custom_call.1} parent=1 // pred_fallthru
      _
    // Predicated region
    $region6: #{tpu_custom_call.1} parent=1 // pred_check
      _
    $region7: #{tpu_custom_call.1} parent=1 // pred_check_branch
      %22 = sbr.rel (0) target = $region9
    $region8: #{tpu_custom_call.1} parent=1 // pred_region
      %s24 = ssub.s32 512, 512
      %25 = vsyncadd [#allocation6], %s24
      %s26 = sshll.u32 [#allocation5], 4
      %s27 = int_to_ptr.vmem [resolvable:$true] %s26
      %32 = dma.hbm_to_vmem [thread:$0]  %s1, 512, %s27, [#allocation6], 128, 128, 8
    $region9: #{tpu_custom_call.1} parent=1 // pred_fallthru
      _
    // Predicated region
    $region10: #{tpu_custom_call.1} parent=1 // pred_check
      _
    $region11: #{tpu_custom_call.1} parent=1 // pred_check_branch
      %34 = sbr.rel (0) target = $region13
    $region12: #{tpu_custom_call.1} parent=1 // pred_region
      _
    $region13: #{tpu_custom_call.1} parent=1 // pred_fallthru
      _
    // Predicated region
    $region14: #{tpu_custom_call.1} parent=1 // pred_check
      _
    $region15: #{tpu_custom_call.1} parent=1 // pred_check_branch
      %36 = sbr.rel (0) target = $region17
    $region16: #{tpu_custom_call.1} parent=1 // pred_region
      %37 = dma.done [#allocation3], 128
    $region17: #{tpu_custom_call.1} parent=1 // pred_fallthru
      _
    // Predicated region
    $region18: #{tpu_custom_call.1} parent=1 // pred_check
      _
    $region19: #{tpu_custom_call.1} parent=1 // pred_check_branch
      %39 = sbr.rel (0) target = $region21
    $region20: #{tpu_custom_call.1} parent=1 // pred_region
      %40 = dma.done [#allocation6], 512
    $region21: #{tpu_custom_call.1} parent=1 // pred_fallthru
      _
    %v41 = vld [vmem:[#allocation2] sm:$0xff]
    %v42 = vld [vmem:[#allocation5] sm:$0xff]
    %v43 = vld [vmem:[#allocation5 + $0x8] sm:$0xff]
    %v44 = vld [vmem:[#allocation5 + $0x10] sm:$0xff]
    %v45 = vld [vmem:[#allocation5 + $0x18] sm:$0xff]
    %v46 = vld [vmem:[%s2] sm:$0x1]
    %v48 = vlaneseq
    %v49 = vshrl.u32 %v48, 7
    %v50 = vsub.s32 0, %v49
    %v51 = vrot.slane %v46, %v50
    %vm53 = vcmask 261120
    %v55 = vsel %vm53, %v41, 0
    %57 = vmatprep.subr.mxu0 0.0
    %58 = vmatpush1.msra.mxu0 %v42
    %59 = vmatprep.subr.mxu0 0.0
    %60 = vmatpush1.msra.mxu0 %v43
    %61 = vmatprep.subr.mxu0 0.0
    %62 = vmatpush1.msra.mxu0 %v44
    %63 = vmatprep.subr.mxu0 0.0
    %64 = vmatpush1.msra.mxu0 %v45
    %65 = vmatprep.subr.mxu0 0.0
    %66 = vmatpush1.msra.mxu0 0.0
    %67 = vmatprep.subr.mxu0 0.0
    %68 = vmatpush1.msra.mxu0 0.0
    %69 = vmatprep.subr.mxu0 0.0
    %70 = vmatpush1.msra.mxu0 0.0
    %71 = vmatprep.subr.mxu0 0.0
    %72 = vmatpush1.msra.mxu0 0.0
    %73 = vmatprep.subr.mxu0 0.0
    %74 = vmatpush1.msra.mxu0 0.0
    %75 = vmatprep.subr.mxu0 0.0
    %76 = vmatpush1.msra.mxu0 0.0
    %77 = vmatprep.subr.mxu0 0.0
    %78 = vmatpush1.msra.mxu0 0.0
    %79 = vmatprep.subr.mxu0 0.0
    %80 = vmatpush1.msra.mxu0 0.0
    %81 = vmatprep.subr.mxu0 0.0
    %82 = vmatpush1.msra.mxu0 0.0
    %83 = vmatprep.subr.mxu0 0.0
    %84 = vmatpush1.msra.mxu0 0.0
    %85 = vmatprep.subr.mxu0 0.0
    %86 = vmatpush1.msra.mxu0 0.0
    %87 = vmatprep.subr.mxu0 0.0
    %88 = vmatpush1.msra.mxu0 0.0
    %89 = vmatprep.subr.mxu0 0.0
    %90 = vmatpush1.msra.mxu0 0.0
    %91 = vmatprep.subr.mxu0 0.0
    %92 = vmatpush1.msra.mxu0 0.0
    %93 = vmatprep.subr.mxu0 0.0
    %94 = vmatpush1.msra.mxu0 0.0
    %95 = vmatprep.subr.mxu0 0.0
    %96 = vmatpush1.msra.mxu0 0.0
    %97 = vmatprep.subr.mxu0 0.0
    %98 = vmatpush1.msra.mxu0 0.0
    %99 = vmatprep.subr.mxu0 0.0
    %100 = vmatpush1.msra.mxu0 0.0
    %101 = vmatprep.subr.mxu0 0.0
    %102 = vmatpush1.msra.mxu0 0.0
    %103 = vmatprep.subr.mxu0 0.0
    %104 = vmatpush1.msra.mxu0 0.0
    %105 = vmatprep.subr.mxu0 0.0
    %106 = vmatpush1.msra.mxu0 0.0
    %107 = vmatprep.subr.mxu0 0.0
    %108 = vmatpush1.msra.mxu0 0.0
    %109 = vmatprep.subr.mxu0 0.0
    %110 = vmatpush1.msra.mxu0 0.0
    %111 = vmatprep.subr.mxu0 0.0
    %112 = vmatpush1.msra.mxu0 0.0
    %113 = vmatprep.subr.mxu0 0.0
    %114 = vmatpush1.msra.mxu0 0.0
    %115 = vmatprep.subr.mxu0 0.0
    %116 = vmatpush1.msra.mxu0 0.0
    %117 = vmatprep.subr.mxu0 0.0
    %118 = vmatpush1.msra.mxu0 0.0
    %119 = vmatprep.subr.mxu0 0.0
    %120 = vmatpush1.msra.mxu0 0.0
    %121 = vmatprep.mubr.f32.mxu0 0.0
    %122 = vmatmul.mubr.f32.gmra.mrb[0].mxu0 %v55
    %v123 = vpop.f32.mrb[0].mxu0
    %v124 = vadd.f32 %v51, %v123
    %v125 = vpop.f32.mrb[0].mxu0
    %126 = vdwg.mxu0
    %vm127 = vcmask 818176
    %128 = vst.msk [vmem:[#allocation7] sm:$0xff] %vm127, %v124
    // Predicated region
    $region22: #{tpu_custom_call.1} parent=1 // pred_check
      _
    $region23: #{tpu_custom_call.1} parent=1 // pred_check_branch
      %130 = sbr.rel (0) target = $region25
    $region24: #{tpu_custom_call.1} parent=1 // pred_region
      %s132 = ssub.s32 128, 128
      %133 = vsyncadd [#allocation4], %s132
      %s135 = sshll.u32 [#allocation7], 4
      %s136 = int_to_ptr.vmem [resolvable:$true] %s135
      %138 = dma.vmem_to_hbm [thread:$0]  %s136, 128, %s3, [#allocation4]
    $region25: #{tpu_custom_call.1} parent=1 // pred_fallthru
      _
    // Predicated region
    $region26: #{tpu_custom_call.1} parent=1 // pred_check
      _
    $region27: #{tpu_custom_call.1} parent=1 // pred_check_branch
      %140 = sbr.rel (0) target = $region29
    $region28: #{tpu_custom_call.1} parent=1 // pred_region
      %141 = dma.done [#allocation4], 128
    $region29: #{tpu_custom_call.1} parent=1 // pred_fallthru
      _
    %142 = vsyncpa [#allocation3], 1
    %143 = vsyncpa [#allocation6], 1
    %144 = vsyncpa [#allocation4], 1

</llo_original>
